<compile_context>
chip_gen: v5e
topology: v5e:2x2
jax: 0.10.0
libtpu: 0.0.40
codegen_flags: <defaults>
</compile_context>

<pallas_src>
import functools

import numpy as np
import jax
import jax.numpy as jnp
from jax.experimental import pallas as pl
from jax.experimental.pallas import tpu as pltpu


# ----------------------------------------------------------------------------
# Pallas kernel: fused 1x1-conv + ReLU + avg-pool (as matmul) + positional add
# Works for both grid layouts: the leading dim of x_ref / out_ref is either 1
# (batch-parallel grid) or B (collapsed grid); the loop is a static unroll.
# ----------------------------------------------------------------------------
def _frame_avg_pool_kernel(x_ref, w_ref, b_ref, pool_ref, pos_ref, out_ref):
    f32 = jnp.float32
    w = w_ref[...]                                # (H, C_in)
    bias = b_ref[...]                             # (H, 1)
    pool = pool_ref[...].astype(f32)              # (T, N)  (bf16 -> f32 cast on VPU)
    pos = pos_ref[...]                            # (H, N)
    for b in range(x_ref.shape[0]):               # static unroll over batch block
        # 1x1 Conv1d over channels == dense matmul on the MXU, then bias + ReLU.
        h = jnp.dot(w, x_ref[b], preferred_element_type=f32) + bias
        h = jnp.maximum(h, 0.0)                   # (H, T)
        # AvgPool1d as matmul with the precomputed averaging matrix, then
        # positional add.  Output store is lane-dense (N = num_clips).
        out_ref[b] = jnp.dot(h, pool, preferred_element_type=f32) + pos


# ----------------------------------------------------------------------------
# wrapper helpers
# ----------------------------------------------------------------------------
@functools.lru_cache(maxsize=None)
def _make_pool_matrix(T, kernel_size, stride):
    """(T, N) matrix P with P[t, n] = 1/kernel_size inside pooling window n.
    Memoized: built on the host and uploaded to the device exactly once."""
    N = (T - kernel_size) // stride + 1
    P = np.zeros((T, N), np.float32)
    for n in range(N):
        P[n * stride:n * stride + kernel_size, n] = 1.0 / kernel_size
    # 0 and 1/k are exactly representable in bf16 when k is a power of two ->
    # halve the DMA of the largest input operand with zero numerical impact.
    dtype = jnp.bfloat16 if (kernel_size & (kernel_size - 1)) == 0 else jnp.float32
    return jnp.asarray(P, dtype), N


def _full_spec(shape):
    zeros = (0,) * len(shape)
    return pl.BlockSpec(shape, lambda b, _z=zeros: _z)


def _default_batch_parallel():
    """Shard the batch across TensorCores only on 2-TC chips (v7x)."""
    try:
        return "v7" in jax.devices()[0].device_kind.lower()
    except Exception:  # pragma: no cover - conservative fallback
        return False


@functools.partial(jax.jit, static_argnames=("batch_parallel",))
def _frame_avg_pool_call(x, conv_w, conv_b, pos_embed, pool_mat, *, batch_parallel):
    B, C_in, T = x.shape
    H = conv_w.shape[0]
    N = pool_mat.shape[1]
    pos_t = pos_embed.astype(jnp.float32).T       # (H, N); fused/constant under jit

    if batch_parallel:
        # v7x: one batch element per TensorCore.
        grid = (B,)
        x_spec = pl.BlockSpec((1, C_in, T), lambda b: (b, 0, 0))
        out_spec = pl.BlockSpec((1, H, N), lambda b: (b, 0, 0))
        semantics = ("parallel",)
    else:
        # v5e/v6e (single TC): one grid step, all operands fetched once.
        grid = (1,)
        x_spec = pl.BlockSpec((B, C_in, T), lambda b: (0, 0, 0))
        out_spec = pl.BlockSpec((B, H, N), lambda b: (0, 0, 0))
        semantics = ("arbitrary",)

    flops = 2 * B * (H * C_in * T + H * T * N)
    bytes_accessed = (x.size * 4 + conv_w.size * 4 + conv_b.size * 4
                      + pool_mat.size * pool_mat.dtype.itemsize
                      + pos_t.size * 4 + B * H * N * 4)

    return pl.pallas_call(
        _frame_avg_pool_kernel,
        out_shape=jax.ShapeDtypeStruct((B, H, N), jnp.float32),
        grid=grid,
        in_specs=[x_spec,                          # x
                  _full_spec((H, C_in)),           # conv weight
                  _full_spec((H, 1)),              # conv bias
                  _full_spec((T, N)),              # pooling matrix
                  _full_spec((H, N))],             # positional embedding (transposed)
        out_specs=out_spec,
        compiler_params=pltpu.CompilerParams(dimension_semantics=semantics),
        cost_estimate=pl.CostEstimate(flops=flops, transcendentals=0,
                                      bytes_accessed=bytes_accessed),
    )(x, conv_w, conv_b, pool_mat, pos_t)


def frame_avg_pool_forward(x, conv_w, conv_b, pos_embed, kernel_size, stride,
                           batch_parallel=None):
    """x: (B, C_in, T) f32; conv_w: (H, C_in); conv_b: (H, 1) or (H,);
    pos_embed: (num_clips, H) or None.  Returns (B, H, num_clips) f32."""
    B, C_in, T = x.shape
    H = conv_w.shape[0]
    pool_mat, N = _make_pool_matrix(int(T), int(kernel_size), int(stride))

    if pos_embed is None:
        pos_embed = jnp.zeros((N, H), jnp.float32)
    else:
        assert pos_embed.shape == (N, H), (pos_embed.shape, (N, H))
    # TODO(synk): nn.Dropout(p=0.1) of LearnPositionalEncoding is omitted
    # (identity at inference); a training-mode stochastic mask is not emitted.

    if batch_parallel is None:
        batch_parallel = _default_batch_parallel()

    return _frame_avg_pool_call(
        jnp.asarray(x, jnp.float32),
        jnp.asarray(conv_w, jnp.float32),
        jnp.asarray(conv_b, jnp.float32).reshape(H, 1),
        jnp.asarray(pos_embed, jnp.float32),
        pool_mat,
        batch_parallel=bool(batch_parallel))


# ----------------------------------------------------------------------------
# pure-JAX reference (mirrors the PyTorch forward, dropout in eval mode)
# ----------------------------------------------------------------------------
def frame_avg_pool_reference(x, conv_w, conv_b, pos_embed, kernel_size, stride):
    h = jnp.maximum(jnp.einsum("hc,bct->bht", conv_w, x) + conv_b.reshape(1, -1, 1), 0.0)
    B, H, T = h.shape
    N = (T - kernel_size) // stride + 1
    win = jnp.stack(
        [h[:, :, n * stride:n * stride + kernel_size].mean(axis=-1) for n in range(N)],
        axis=-1)
    if pos_embed is not None:
        win = win + pos_embed.T[None]
    return win


# ----------------------------------------------------------------------------
# main
# ----------------------------------------------------------------------------
if __name__ == "__main__":
    # FrameAvgPool(input_size=64, hidden_size=32, kernel_size=2, stride=2,
    #              use_position=True, num_clips=128)  on input (B=2, 64, T=256)
    B, C_in, T = 2, 64, 256
    H = 32
    kernel_size, stride = 2, 2
    num_clips = (T - kernel_size) // stride + 1      # 128 -> lane-dense output

    key = jax.random.PRNGKey(0)
    kx, kw, kb, kp = jax.random.split(key, 4)
    x = jax.random.normal(kx, (B, C_in, T), jnp.float32)

    bound = 1.0 / np.sqrt(C_in)                      # Conv1d default init range
    conv_w = jax.random.uniform(kw, (H, C_in), jnp.float32, -bound, bound)
    conv_b = jax.random.uniform(kb, (H, 1), jnp.float32, -bound, bound)
    pos_embed = jax.random.uniform(kp, (num_clips, H), jnp.float32, 0.0, 1.0)  # nn.init.uniform_

    ref = frame_avg_pool_reference(x, conv_w, conv_b, pos_embed, kernel_size, stride)

    # Collapsed-batch path (default on single-TC v5e/v6e).
    out_collapsed = jax.block_until_ready(
        frame_avg_pool_forward(x, conv_w, conv_b, pos_embed, kernel_size, stride,
                               batch_parallel=False))
    # Batch-parallel path (default on 2-TC v7x).
    out_parallel = jax.block_until_ready(
        frame_avg_pool_forward(x, conv_w, conv_b, pos_embed, kernel_size, stride,
                               batch_parallel=True))

    for out in (out_collapsed, out_parallel):
        assert out.shape == (B, H, num_clips), out.shape
        assert bool(jnp.all(jnp.isfinite(out)))
        np.testing.assert_allclose(np.asarray(out), np.asarray(ref),
                                   rtol=1e-5, atol=1e-5)
    print("KERNEL_OK")
</pallas_src>

<mosaic_0001>
module attributes {stable_mosaic.version = 11 : i64} {
  func.func @_frame_avg_pool_kernel(%arg0: i32, %arg1: memref<2x64x256xf32, #tpu.memory_space<vmem>>, %arg2: memref<32x64xf32, #tpu.memory_space<vmem>>, %arg3: memref<32x1xf32, #tpu.memory_space<vmem>>, %arg4: memref<256x128xbf16, #tpu.memory_space<vmem>>, %arg5: memref<32x128xf32, #tpu.memory_space<vmem>>, %arg6: memref<2x32x128xf32, #tpu.memory_space<vmem>>) attributes {dimension_semantics = [#tpu.dimension_semantics<arbitrary>], iteration_bounds = array<i64: 1>, scalar_prefetch = 0 : i64, scratch_operands = 0 : i64, tpu.core_type = #tpu.core_type<tc>, window_params = [{pipeline_mode = #tpu.pipeline_mode<synchronous>, transform_indices = @transform_0, window_bounds = array<i64: 2, 64, 256>}, {pipeline_mode = #tpu.pipeline_mode<synchronous>, transform_indices = @transform_1, window_bounds = array<i64: 32, 64>}, {pipeline_mode = #tpu.pipeline_mode<synchronous>, transform_indices = @transform_2, window_bounds = array<i64: 32, 1>}, {pipeline_mode = #tpu.pipeline_mode<synchronous>, transform_indices = @transform_3, window_bounds = array<i64: 256, 128>}, {pipeline_mode = #tpu.pipeline_mode<synchronous>, transform_indices = @transform_4, window_bounds = array<i64: 32, 128>}, {pipeline_mode = #tpu.pipeline_mode<synchronous>, transform_indices = @transform_5, window_bounds = array<i64: 2, 32, 128>}]} {
    %c0 = arith.constant 0 : index
    %c0_0 = arith.constant 0 : index
    %0 = vector.load %arg2[%c0, %c0_0] : memref<32x64xf32, #tpu.memory_space<vmem>>, vector<32x64xf32>
    %c0_1 = arith.constant 0 : index
    %c0_2 = arith.constant 0 : index
    %1 = vector.load %arg3[%c0_1, %c0_2] : memref<32x1xf32, #tpu.memory_space<vmem>>, vector<32x1xf32>
    %c0_3 = arith.constant 0 : index
    %c0_4 = arith.constant 0 : index
    %2 = vector.load %arg4[%c0_3, %c0_4] : memref<256x128xbf16, #tpu.memory_space<vmem>>, vector<256x128xbf16>
    %3 = arith.extf %2 : vector<256x128xbf16> to vector<256x128xf32>
    %c0_5 = arith.constant 0 : index
    %c0_6 = arith.constant 0 : index
    %4 = vector.load %arg5[%c0_5, %c0_6] : memref<32x128xf32, #tpu.memory_space<vmem>>, vector<32x128xf32>
    %c0_7 = arith.constant 0 : index
    %c0_8 = arith.constant 0 : index
    %c0_9 = arith.constant 0 : index
    %5 = vector.load %arg1[%c0_7, %c0_8, %c0_9] : memref<2x64x256xf32, #tpu.memory_space<vmem>>, vector<1x64x256xf32>
    %6 = vector.shape_cast %5 : vector<1x64x256xf32> to vector<64x256xf32>
    %cst = arith.constant dense<0.000000e+00> : vector<32x256xf32>
    %7 = tpu.matmul %0, %6, %cst {dimension_numbers = #tpu.dot_dimension_numbers<[1], [0], [0], [1], [0, 0, 1, 1], [], []>} : vector<32x64xf32>, vector<64x256xf32>, vector<32x256xf32> -> vector<32x256xf32>
    %8 = vector.broadcast %1 : vector<32x1xf32> to vector<32x256xf32>
    %9 = arith.addf %7, %8 : vector<32x256xf32>
    %cst_10 = arith.constant 0.000000e+00 : f32
    %10 = vector.broadcast %cst_10 : f32 to vector<32x256xf32>
    %11 = arith.maximumf %9, %10 : vector<32x256xf32>
    %cst_11 = arith.constant dense<0.000000e+00> : vector<32x128xf32>
    %12 = tpu.matmul %11, %3, %cst_11 {dimension_numbers = #tpu.dot_dimension_numbers<[1], [0], [0], [1], [0, 0, 1, 1], [], []>} : vector<32x256xf32>, vector<256x128xf32>, vector<32x128xf32> -> vector<32x128xf32>
    %13 = arith.addf %12, %4 : vector<32x128xf32>
    %c0_12 = arith.constant 0 : index
    %c0_13 = arith.constant 0 : index
    %c0_14 = arith.constant 0 : index
    %14 = vector.load %arg6[%c0_12, %c0_13, %c0_14] : memref<2x32x128xf32, #tpu.memory_space<vmem>>, vector<1x32x128xf32>
    %15 = vector.shape_cast %14 : vector<1x32x128xf32> to vector<32x128xf32>
    %16 = vector.shape_cast %13 : vector<32x128xf32> to vector<1x32x128xf32>
    tpu.vector_store %arg6[%c0_12, %c0_13, %c0_14], %16 {strides = array<i32>} : memref<2x32x128xf32, #tpu.memory_space<vmem>>, vector<1x32x128xf32>,
    %c1 = arith.constant 1 : index
    %c0_15 = arith.constant 0 : index
    %c0_16 = arith.constant 0 : index
    %17 = vector.load %arg1[%c1, %c0_15, %c0_16] : memref<2x64x256xf32, #tpu.memory_space<vmem>>, vector<1x64x256xf32>
    %18 = vector.shape_cast %17 : vector<1x64x256xf32> to vector<64x256xf32>
    %cst_17 = arith.constant dense<0.000000e+00> : vector<32x256xf32>
    %19 = tpu.matmul %0, %18, %cst_17 {dimension_numbers = #tpu.dot_dimension_numbers<[1], [0], [0], [1], [0, 0, 1, 1], [], []>} : vector<32x64xf32>, vector<64x256xf32>, vector<32x256xf32> -> vector<32x256xf32>
    %20 = vector.broadcast %1 : vector<32x1xf32> to vector<32x256xf32>
    %21 = arith.addf %19, %20 : vector<32x256xf32>
    %cst_18 = arith.constant 0.000000e+00 : f32
    %22 = vector.broadcast %cst_18 : f32 to vector<32x256xf32>
    %23 = arith.maximumf %21, %22 : vector<32x256xf32>
    %cst_19 = arith.constant dense<0.000000e+00> : vector<32x128xf32>
    %24 = tpu.matmul %23, %3, %cst_19 {dimension_numbers = #tpu.dot_dimension_numbers<[1], [0], [0], [1], [0, 0, 1, 1], [], []>} : vector<32x256xf32>, vector<256x128xf32>, vector<32x128xf32> -> vector<32x128xf32>
    %25 = arith.addf %24, %4 : vector<32x128xf32>
    %c1_20 = arith.constant 1 : index
    %c0_21 = arith.constant 0 : index
    %c0_22 = arith.constant 0 : index
    %26 = vector.load %arg6[%c1_20, %c0_21, %c0_22] : memref<2x32x128xf32, #tpu.memory_space<vmem>>, vector<1x32x128xf32>
    %27 = vector.shape_cast %26 : vector<1x32x128xf32> to vector<32x128xf32>
    %28 = vector.shape_cast %25 : vector<32x128xf32> to vector<1x32x128xf32>
    tpu.vector_store %arg6[%c1_20, %c0_21, %c0_22], %28 {strides = array<i32>} : memref<2x32x128xf32, #tpu.memory_space<vmem>>, vector<1x32x128xf32>,
    return
  }
  func.func @transform_0(%arg0: i32) -> (i32, i32, i32) {
    %c0_i32 = arith.constant 0 : i32
    %c0_i32_0 = arith.constant 0 : i32
    %c0_i32_1 = arith.constant 0 : i32
    %c0_i32_2 = arith.constant 0 : i32
    return %c0_i32, %c0_i32_0, %c0_i32_1 : i32, i32, i32
  }
  func.func @transform_1(%arg0: i32) -> (i32, i32) {
    %c0_i32 = arith.constant 0 : i32
    %c0_i32_0 = arith.constant 0 : i32
    %c0_i32_1 = arith.constant 0 : i32
    return %c0_i32, %c0_i32_0 : i32, i32
  }
  func.func @transform_2(%arg0: i32) -> (i32, i32) {
    %c0_i32 = arith.constant 0 : i32
    %c0_i32_0 = arith.constant 0 : i32
    %c0_i32_1 = arith.constant 0 : i32
    return %c0_i32, %c0_i32_0 : i32, i32
  }
  func.func @transform_3(%arg0: i32) -> (i32, i32) {
    %c0_i32 = arith.constant 0 : i32
    %c0_i32_0 = arith.constant 0 : i32
    %c0_i32_1 = arith.constant 0 : i32
    return %c0_i32, %c0_i32_0 : i32, i32
  }
  func.func @transform_4(%arg0: i32) -> (i32, i32) {
    %c0_i32 = arith.constant 0 : i32
    %c0_i32_0 = arith.constant 0 : i32
    %c0_i32_1 = arith.constant 0 : i32
    return %c0_i32, %c0_i32_0 : i32, i32
  }
  func.func @transform_5(%arg0: i32) -> (i32, i32, i32) {
    %c0_i32 = arith.constant 0 : i32
    %c0_i32_0 = arith.constant 0 : i32
    %c0_i32_1 = arith.constant 0 : i32
    %c0_i32_2 = arith.constant 0 : i32
    return %c0_i32, %c0_i32_0, %c0_i32_1 : i32, i32, i32
  }
}

</mosaic_0001>

<llo_original>
// kernel: _frame_avg_pool_call.1
$region0: #{_frame_avg_pool_call.1}
  #allocation0 [shape = 'u32[]', space=smem, size = 0x4, offset = 0x4, fixed_abs, tag = 'smem constant byte address 0x4 - core index']
  #allocation1 [shape = 'u32[72,128]{1,0:T(1,128)}', space=vmem, size = 0x9000, scoped, tag = 'internal scratch']
  %s0 = inlined_call_operand.hbm [shape: f32[2,64,256], index: 0, kind: input, shape index: {}]
  %s1 = inlined_call_operand.vmem [shape: f32[32,64], index: 1, kind: input, shape index: {}]
  %s2 = inlined_call_operand.vmem [shape: f32[32,1], index: 2, kind: input, shape index: {}]
  %s3 = inlined_call_operand.hbm [shape: bf16[256,128], index: 3, kind: input, shape index: {}]
  %s4 = inlined_call_operand.hbm [shape: f32[32,128], index: 4, kind: input, shape index: {}]
  %s5 = inlined_call_operand.hbm [shape: f32[2,32,128], index: 5, kind: output, shape index: {}]
  %s6 = sld [smem:[#allocation0]]
  $region42: #{_frame_avg_pool_call.1} parent=0
    _
  %s8 = ssub.s32 1, %s6
  %s9 = scalar_select 0, %s8, %s6
  $region1: #{_frame_avg_pool_call.1} parent=0
    #allocation2 [shape = 'u8[131072]{0}', space=vmem, size = 0x20000, scoped, tag = 'input window, operand 0, single buffered']
    #allocation3 [shape = 's32[1]{0}', space=sflag, size = 0x4, scoped, tag = 'scoped memory for _frame_avg_pool_call.1']
    #allocation4 [shape = 's32[1]{0}', space=sflag, size = 0x4, scoped, tag = 'scoped memory for _frame_avg_pool_call.1']
    #allocation5 [shape = 'u8[65536]{0}', space=vmem, size = 0x10000, scoped, tag = 'input window, operand 3, single buffered']
    #allocation6 [shape = 's32[1]{0}', space=sflag, size = 0x4, scoped, tag = 'scoped memory for _frame_avg_pool_call.1']
    #allocation7 [shape = 'u8[16384]{0}', space=vmem, size = 0x4000, scoped, tag = 'input window, operand 4, single buffered']
    #allocation8 [shape = 'u8[32768]{0}', space=vmem, size = 0x8000, scoped, tag = 'output window, operand 0, single buffered']
    %10 = vsyncpa [#allocation3], 0
    %11 = vsyncpa [#allocation6], 0
    %12 = vsyncpa [#allocation4], 0
    // Predicated region
    $region2: #{_frame_avg_pool_call.1} parent=1 // pred_check
      _
    $region3: #{_frame_avg_pool_call.1} parent=1 // pred_check_branch
      %14 = sbr.rel (0) target = $region5
    $region4: #{_frame_avg_pool_call.1} parent=1 // pred_region
      %16 = vsyncadd [#allocation3], 0
      %s17 = sshll.u32 %s0, 4
      %s18 = int_to_ptr.hbm [resolvable:$true] %s17
      %s19 = sshll.u32 [#allocation2], 4
      %s20 = int_to_ptr.vmem [resolvable:$true] %s19
      %25 = dma.hbm_to_vmem [thread:$0]  %s18, 4096, %s20, [#allocation3], 256, 256, 16
    $region5: #{_frame_avg_pool_call.1} parent=1 // pred_fallthru
      _
    // Predicated region
    $region6: #{_frame_avg_pool_call.1} parent=1 // pred_check
      _
    $region7: #{_frame_avg_pool_call.1} parent=1 // pred_check_branch
      %27 = sbr.rel (0) target = $region9
    $region8: #{_frame_avg_pool_call.1} parent=1 // pred_region
      _
    $region9: #{_frame_avg_pool_call.1} parent=1 // pred_fallthru
      _
    // Predicated region
    $region10: #{_frame_avg_pool_call.1} parent=1 // pred_check
      _
    $region11: #{_frame_avg_pool_call.1} parent=1 // pred_check_branch
      %29 = sbr.rel (0) target = $region13
    $region12: #{_frame_avg_pool_call.1} parent=1 // pred_region
      _
    $region13: #{_frame_avg_pool_call.1} parent=1 // pred_fallthru
      _
    // Predicated region
    $region14: #{_frame_avg_pool_call.1} parent=1 // pred_check
      _
    $region15: #{_frame_avg_pool_call.1} parent=1 // pred_check_branch
      %31 = sbr.rel (0) target = $region17
    $region16: #{_frame_avg_pool_call.1} parent=1 // pred_region
      %33 = vsyncadd [#allocation6], 0
      %s34 = sshll.u32 %s3, 4
      %s35 = int_to_ptr.hbm [resolvable:$true] %s34
      %s36 = sshll.u32 [#allocation5], 4
      %s37 = int_to_ptr.vmem [resolvable:$true] %s36
      %42 = dma.hbm_to_vmem [thread:$0]  %s35, 2048, %s37, [#allocation6], 64, 64, 4
    $region17: #{_frame_avg_pool_call.1} parent=1 // pred_fallthru
      _
    // Predicated region
    $region18: #{_frame_avg_pool_call.1} parent=1 // pred_check
      _
    $region19: #{_frame_avg_pool_call.1} parent=1 // pred_check_branch
      %44 = sbr.rel (0) target = $region21
    $region20: #{_frame_avg_pool_call.1} parent=1 // pred_region
      %46 = vsyncadd [#allocation6], 0
      %s47 = sshll.u32 %s4, 4
      %s48 = int_to_ptr.hbm [resolvable:$true] %s47
      %s49 = sshll.u32 [#allocation7], 4
      %s50 = int_to_ptr.vmem [resolvable:$true] %s49
      %55 = dma.hbm_to_vmem [thread:$0]  %s48, 512, %s50, [#allocation6], 128, 128, 8
    $region21: #{_frame_avg_pool_call.1} parent=1 // pred_fallthru
      _
    // Predicated region
    $region22: #{_frame_avg_pool_call.1} parent=1 // pred_check
      _
    $region23: #{_frame_avg_pool_call.1} parent=1 // pred_check_branch
      %57 = sbr.rel (0) target = $region25
    $region24: #{_frame_avg_pool_call.1} parent=1 // pred_region
      %59 = dma.done [#allocation3], 4096
    $region25: #{_frame_avg_pool_call.1} parent=1 // pred_fallthru
      _
    // Predicated region
    $region26: #{_frame_avg_pool_call.1} parent=1 // pred_check
      _
    $region27: #{_frame_avg_pool_call.1} parent=1 // pred_check_branch
      %61 = sbr.rel (0) target = $region29
    $region28: #{_frame_avg_pool_call.1} parent=1 // pred_region
      %63 = dma.done [#allocation6], 2048
    $region29: #{_frame_avg_pool_call.1} parent=1 // pred_fallthru
      _
    // Predicated region
    $region30: #{_frame_avg_pool_call.1} parent=1 // pred_check
      _
    $region31: #{_frame_avg_pool_call.1} parent=1 // pred_check_branch
      %65 = sbr.rel (0) target = $region33
    $region32: #{_frame_avg_pool_call.1} parent=1 // pred_region
      %67 = dma.done [#allocation6], 512
    $region33: #{_frame_avg_pool_call.1} parent=1 // pred_fallthru
      _
    %v68 = vld [vmem:[%s1] sm:$0xff]
    %v69 = vld [vmem:[%s1 + $0x8] sm:$0xff]
    %v70 = vld [vmem:[%s1 + $0x10] sm:$0xff]
    %v71 = vld [vmem:[%s1 + $0x18] sm:$0xff]
    %v72 = vld [vmem:[%s2] sm:$0xff]
    %v73 = vld [vmem:[%s2 + $0x8] sm:$0xff]
    %v74 = vld [vmem:[%s2 + $0x10] sm:$0xff]
    %v75 = vld [vmem:[%s2 + $0x18] sm:$0xff]
    %v76 = vld [vmem:[#allocation5] sm:$0xf]
    %v77 = vld [vmem:[#allocation5 + $0x4] sm:$0xf]
    %v78 = vld [vmem:[#allocation5 + $0x8] sm:$0xf]
    %v79 = vld [vmem:[#allocation5 + $0xc] sm:$0xf]
    %v80 = vld [vmem:[#allocation5 + $0x10] sm:$0xf]
    %v81 = vld [vmem:[#allocation5 + $0x14] sm:$0xf]
    %v82 = vld [vmem:[#allocation5 + $0x18] sm:$0xf]
    %v83 = vld [vmem:[#allocation5 + $0x1c] sm:$0xf]
    %v84 = vld [vmem:[#allocation5 + $0x20] sm:$0xf]
    %v85 = vld [vmem:[#allocation5 + $0x24] sm:$0xf]
    %v86 = vld [vmem:[#allocation5 + $0x28] sm:$0xf]
    %v87 = vld [vmem:[#allocation5 + $0x2c] sm:$0xf]
    %v88 = vld [vmem:[#allocation5 + $0x30] sm:$0xf]
    %v89 = vld [vmem:[#allocation5 + $0x34] sm:$0xf]
    %v90 = vld [vmem:[#allocation5 + $0x38] sm:$0xf]
    %v91 = vld [vmem:[#allocation5 + $0x3c] sm:$0xf]
    %v92 = vld [vmem:[#allocation5 + $0x40] sm:$0xf]
    %v93 = vld [vmem:[#allocation5 + $0x44] sm:$0xf]
    %v94 = vld [vmem:[#allocation5 + $0x48] sm:$0xf]
    %v95 = vld [vmem:[#allocation5 + $0x4c] sm:$0xf]
    %v96 = vld [vmem:[#allocation5 + $0x50] sm:$0xf]
    %v97 = vld [vmem:[#allocation5 + $0x54] sm:$0xf]
    %v98 = vld [vmem:[#allocation5 + $0x58] sm:$0xf]
    %v99 = vld [vmem:[#allocation5 + $0x5c] sm:$0xf]
    %v100 = vld [vmem:[#allocation5 + $0x60] sm:$0xf]
    %v101 = vld [vmem:[#allocation5 + $0x64] sm:$0xf]
    %v102 = vld [vmem:[#allocation5 + $0x68] sm:$0xf]
    %v103 = vld [vmem:[#allocation5 + $0x6c] sm:$0xf]
    %v104 = vld [vmem:[#allocation5 + $0x70] sm:$0xf]
    %v105 = vld [vmem:[#allocation5 + $0x74] sm:$0xf]
    %v106 = vld [vmem:[#allocation5 + $0x78] sm:$0xf]
    %v107 = vld [vmem:[#allocation5 + $0x7c] sm:$0xf]
    %v108 = vunpack.c.l.bf16 %v76
    %v109 = vunpack.c.l.bf16 %v77
    %v110 = vunpack.c.l.bf16 %v78
    %v111 = vunpack.c.l.bf16 %v79
    %v112 = vunpack.c.l.bf16 %v80
    %v113 = vunpack.c.l.bf16 %v81
    %v114 = vunpack.c.l.bf16 %v82
    %v115 = vunpack.c.l.bf16 %v83
    %v116 = vunpack.c.l.bf16 %v84
    %v117 = vunpack.c.l.bf16 %v85
    %v118 = vunpack.c.l.bf16 %v86
    %v119 = vunpack.c.l.bf16 %v87
    %v120 = vunpack.c.l.bf16 %v88
    %v121 = vunpack.c.l.bf16 %v89
    %v122 = vunpack.c.l.bf16 %v90
    %v123 = vunpack.c.l.bf16 %v91
    %v124 = vunpack.c.l.bf16 %v92
    %v125 = vunpack.c.l.bf16 %v93
    %v126 = vunpack.c.l.bf16 %v94
    %v127 = vunpack.c.l.bf16 %v95
    %v128 = vunpack.c.l.bf16 %v96
    %v129 = vunpack.c.l.bf16 %v97
    %v130 = vunpack.c.l.bf16 %v98
    %v131 = vunpack.c.l.bf16 %v99
    %v132 = vunpack.c.l.bf16 %v100
    %v133 = vunpack.c.l.bf16 %v101
    %v134 = vunpack.c.l.bf16 %v102
    %v135 = vunpack.c.l.bf16 %v103
    %v136 = vunpack.c.l.bf16 %v104
    %v137 = vunpack.c.l.bf16 %v105
    %v138 = vunpack.c.l.bf16 %v106
    %v139 = vunpack.c.l.bf16 %v107
    %v140 = vld [vmem:[#allocation7] sm:$0xff]
    %v141 = vld [vmem:[#allocation7 + $0x8] sm:$0xff]
    %v142 = vld [vmem:[#allocation7 + $0x10] sm:$0xff]
    %v143 = vld [vmem:[#allocation7 + $0x18] sm:$0xff]
    %v144 = vld [vmem:[#allocation2] sm:$0xff]
    %v145 = vld [vmem:[#allocation2 + $0x8] sm:$0xff]
    %v146 = vld [vmem:[#allocation2 + $0x10] sm:$0xff]
    %v147 = vld [vmem:[#allocation2 + $0x18] sm:$0xff]
    %v148 = vld [vmem:[#allocation2 + $0x20] sm:$0xff]
    %v149 = vld [vmem:[#allocation2 + $0x28] sm:$0xff]
    %v150 = vld [vmem:[#allocation2 + $0x30] sm:$0xff]
    %v151 = vld [vmem:[#allocation2 + $0x38] sm:$0xff]
    %v152 = vld [vmem:[#allocation2 + $0x40] sm:$0xff]
    %v153 = vld [vmem:[#allocation2 + $0x48] sm:$0xff]
    %v154 = vld [vmem:[#allocation2 + $0x50] sm:$0xff]
    %v155 = vld [vmem:[#allocation2 + $0x58] sm:$0xff]
    %v156 = vld [vmem:[#allocation2 + $0x60] sm:$0xff]
    %v157 = vld [vmem:[#allocation2 + $0x68] sm:$0xff]
    %v158 = vld [vmem:[#allocation2 + $0x70] sm:$0xff]
    %v159 = vld [vmem:[#allocation2 + $0x78] sm:$0xff]
    %161 = vset.pattern.permute.xlu0 0
    %162 = vperm.xlu0 %161, %v72
    %v163 = vpop.permute.xlu0 %162
    %166 = vset.pattern.permute.xlu0 0
    %167 = vperm.xlu0 %166, %v73
    %v168 = vpop.permute.xlu0 %167
    %171 = vset.pattern.permute.xlu0 0
    %172 = vperm.xlu0 %171, %v74
    %v173 = vpop.permute.xlu0 %172
    %176 = vset.pattern.permute.xlu0 0
    %177 = vperm.xlu0 %176, %v75
    %v178 = vpop.permute.xlu0 %177
    %vm180 = vcmask 523264
    %v182 = vsel %vm180, %v68, 0
    %v185 = vsel %vm180, %v69, 0
    %v188 = vsel %vm180, %v70, 0
    %v191 = vsel %vm180, %v71, 0
    %193 = vmatpush.msra.mxu0 0.0
    %194 = vmatpush.msra.mxu0 0.0
    %195 = vmatpush.msra.mxu0 0.0
    %196 = vmatpush.msra.mxu0 0.0
    %197 = vmatpush.msra.mxu0 0.0
    %198 = vmatpush.msra.mxu0 0.0
    %199 = vmatpush.msra.mxu0 0.0
    %200 = vmatpush.msra.mxu0 0.0
    %201 = vmatpush.msra.mxu0 %v158
    %202 = vmatpush.msra.mxu0 %v156
    %203 = vmatpush.msra.mxu0 %v154
    %204 = vmatpush.msra.mxu0 %v152
    %205 = vmatpush.msra.mxu0 %v150
    %206 = vmatpush.msra.mxu0 %v148
    %207 = vmatpush.msra.mxu0 %v146
    %208 = vmatpush.msra.mxu0 %v144
    %209 = vmatmul.f32.gmra.mxu0 %v182
    %v210 = vpop.f32.mrf.mxu0
    %v211 = vadd.f32 %v163, %v210
    %212 = vmatmul.f32.gmra.mxu0 %v185
    %v213 = vpop.f32.mrf.mxu0
    %v214 = vadd.f32 %v168, %v213
    %215 = vmatmul.f32.gmra.mxu0 %v188
    %v216 = vpop.f32.mrf.mxu0
    %v217 = vadd.f32 %v173, %v216
    %218 = vmatmul.f32.gmra.mxu0 %v191
    %v219 = vpop.f32.mrf.mxu0
    %v220 = vadd.f32 %v178, %v219
    %221 = vdwg.mxu0
    %222 = vmatpush.msra.mxu0 0.0
    %223 = vmatpush.msra.mxu0 0.0
    %224 = vmatpush.msra.mxu0 0.0
    %225 = vmatpush.msra.mxu0 0.0
    %226 = vmatpush.msra.mxu0 0.0
    %227 = vmatpush.msra.mxu0 0.0
    %228 = vmatpush.msra.mxu0 0.0
    %229 = vmatpush.msra.mxu0 0.0
    %230 = vmatpush.msra.mxu0 %v159
    %231 = vmatpush.msra.mxu0 %v157
    %232 = vmatpush.msra.mxu0 %v155
    %233 = vmatpush.msra.mxu0 %v153
    %234 = vmatpush.msra.mxu0 %v151
    %235 = vmatpush.msra.mxu0 %v149
    %236 = vmatpush.msra.mxu0 %v147
    %237 = vmatpush.msra.mxu0 %v145
    %238 = vmatmul.f32.gmra.mxu0 %v182
    %v239 = vpop.f32.mrf.mxu0
    %v240 = vadd.f32 %v163, %v239
    %241 = vmatmul.f32.gmra.mxu0 %v185
    %v242 = vpop.f32.mrf.mxu0
    %v243 = vadd.f32 %v168, %v242
    %244 = vmatmul.f32.gmra.mxu0 %v188
    %v245 = vpop.f32.mrf.mxu0
    %v246 = vadd.f32 %v173, %v245
    %247 = vmatmul.f32.gmra.mxu0 %v191
    %v248 = vpop.f32.mrf.mxu0
    %v249 = vadd.f32 %v178, %v248
    %250 = vdwg.mxu0
    %v251 = vmax.f32 %v211, 0.0
    %v252 = vmax.f32 %v240, 0.0
    %v253 = vmax.f32 %v214, 0.0
    %v254 = vmax.f32 %v243, 0.0
    %v255 = vmax.f32 %v217, 0.0
    %v256 = vmax.f32 %v246, 0.0
    %v257 = vmax.f32 %v220, 0.0
    %v258 = vmax.f32 %v249, 0.0
    %259 = vmatpush.msra.mxu0 %v123
    %260 = vmatpush.msra.mxu0 %v122
    %261 = vmatpush.msra.mxu0 %v121
    %262 = vmatpush.msra.mxu0 %v120
    %263 = vmatpush.msra.mxu0 %v119
    %264 = vmatpush.msra.mxu0 %v118
    %265 = vmatpush.msra.mxu0 %v117
    %266 = vmatpush.msra.mxu0 %v116
    %267 = vmatpush.msra.mxu0 %v115
    %268 = vmatpush.msra.mxu0 %v114
    %269 = vmatpush.msra.mxu0 %v113
    %270 = vmatpush.msra.mxu0 %v112
    %271 = vmatpush.msra.mxu0 %v111
    %272 = vmatpush.msra.mxu0 %v110
    %273 = vmatpush.msra.mxu0 %v109
    %274 = vmatpush.msra.mxu0 %v108
    %275 = vmatmul.f32.gmra.mxu0 %v251
    %v276 = vpop.f32.mrf.mxu0
    %v277 = vadd.f32 %v140, %v276
    %278 = vmatmul.f32.gmra.mxu0 %v253
    %v279 = vpop.f32.mrf.mxu0
    %v280 = vadd.f32 %v141, %v279
    %281 = vmatmul.f32.gmra.mxu0 %v255
    %v282 = vpop.f32.mrf.mxu0
    %v283 = vadd.f32 %v142, %v282
    %284 = vmatmul.f32.gmra.mxu0 %v257
    %v285 = vpop.f32.mrf.mxu0
    %v286 = vadd.f32 %v143, %v285
    %287 = vdwg.mxu0
    %288 = vmatpush.msra.mxu0 %v139
    %289 = vmatpush.msra.mxu0 %v138
    %290 = vmatpush.msra.mxu0 %v137
    %291 = vmatpush.msra.mxu0 %v136
    %292 = vmatpush.msra.mxu0 %v135
    %293 = vmatpush.msra.mxu0 %v134
    %294 = vmatpush.msra.mxu0 %v133
    %295 = vmatpush.msra.mxu0 %v132
    %296 = vmatpush.msra.mxu0 %v131
    %297 = vmatpush.msra.mxu0 %v130
    %298 = vmatpush.msra.mxu0 %v129
    %299 = vmatpush.msra.mxu0 %v128
    %300 = vmatpush.msra.mxu0 %v127
    %301 = vmatpush.msra.mxu0 %v126
    %302 = vmatpush.msra.mxu0 %v125
    %303 = vmatpush.msra.mxu0 %v124
    %304 = vmatmul.f32.gmra.mxu0 %v252
    %v305 = vpop.f32.mrf.mxu0
    %v306 = vadd.f32 %v277, %v305
    %307 = vmatmul.f32.gmra.mxu0 %v254
    %v308 = vpop.f32.mrf.mxu0
    %v309 = vadd.f32 %v280, %v308
    %310 = vmatmul.f32.gmra.mxu0 %v256
    %v311 = vpop.f32.mrf.mxu0
    %v312 = vadd.f32 %v283, %v311
    %313 = vmatmul.f32.gmra.mxu0 %v258
    %v314 = vpop.f32.mrf.mxu0
    %v315 = vadd.f32 %v286, %v314
    %316 = vdwg.mxu0
    %317 = vst [vmem:[#allocation8] sm:$0xff] %v306
    %318 = vst [vmem:[#allocation8 + $0x8] sm:$0xff] %v309
    %319 = vst [vmem:[#allocation8 + $0x10] sm:$0xff] %v312
    %320 = vst [vmem:[#allocation8 + $0x18] sm:$0xff] %v315
    %s321 = scalar_lea.vmem [#allocation2], 128
    %v322 = vld [vmem:[%s321] sm:$0xff]
    %v323 = vld [vmem:[%s321 + $0x8] sm:$0xff]
    %v324 = vld [vmem:[%s321 + $0x10] sm:$0xff]
    %v325 = vld [vmem:[%s321 + $0x18] sm:$0xff]
    %v326 = vld [vmem:[%s321 + $0x20] sm:$0xff]
    %v327 = vld [vmem:[%s321 + $0x28] sm:$0xff]
    %v328 = vld [vmem:[%s321 + $0x30] sm:$0xff]
    %v329 = vld [vmem:[%s321 + $0x38] sm:$0xff]
    %v330 = vld [vmem:[%s321 + $0x40] sm:$0xff]
    %v331 = vld [vmem:[%s321 + $0x48] sm:$0xff]
    %v332 = vld [vmem:[%s321 + $0x50] sm:$0xff]
    %v333 = vld [vmem:[%s321 + $0x58] sm:$0xff]
    %v334 = vld [vmem:[%s321 + $0x60] sm:$0xff]
    %v335 = vld [vmem:[%s321 + $0x68] sm:$0xff]
    %v336 = vld [vmem:[%s321 + $0x70] sm:$0xff]
    %v337 = vld [vmem:[%s321 + $0x78] sm:$0xff]
    %338 = vmatpush.msra.mxu0 0.0
    %339 = vmatpush.msra.mxu0 0.0
    %340 = vmatpush.msra.mxu0 0.0
    %341 = vmatpush.msra.mxu0 0.0
    %342 = vmatpush.msra.mxu0 0.0
    %343 = vmatpush.msra.mxu0 0.0
    %344 = vmatpush.msra.mxu0 0.0
    %345 = vmatpush.msra.mxu0 0.0
    %346 = vmatpush.msra.mxu0 %v336
    %347 = vmatpush.msra.mxu0 %v334
    %348 = vmatpush.msra.mxu0 %v332
    %349 = vmatpush.msra.mxu0 %v330
    %350 = vmatpush.msra.mxu0 %v328
    %351 = vmatpush.msra.mxu0 %v326
    %352 = vmatpush.msra.mxu0 %v324
    %353 = vmatpush.msra.mxu0 %v322
    %354 = vmatmul.f32.gmra.mxu0 %v182
    %v355 = vpop.f32.mrf.mxu0
    %v356 = vadd.f32 %v163, %v355
    %357 = vmatmul.f32.gmra.mxu0 %v185
    %v358 = vpop.f32.mrf.mxu0
    %v359 = vadd.f32 %v168, %v358
    %360 = vmatmul.f32.gmra.mxu0 %v188
    %v361 = vpop.f32.mrf.mxu0
    %v362 = vadd.f32 %v173, %v361
    %363 = vmatmul.f32.gmra.mxu0 %v191
    %v364 = vpop.f32.mrf.mxu0
    %v365 = vadd.f32 %v178, %v364
    %366 = vdwg.mxu0
    %367 = vmatpush.msra.mxu0 0.0
    %368 = vmatpush.msra.mxu0 0.0
    %369 = vmatpush.msra.mxu0 0.0
    %370 = vmatpush.msra.mxu0 0.0
    %371 = vmatpush.msra.mxu0 0.0
    %372 = vmatpush.msra.mxu0 0.0
    %373 = vmatpush.msra.mxu0 0.0
    %374 = vmatpush.msra.mxu0 0.0
    %375 = vmatpush.msra.mxu0 %v337
    %376 = vmatpush.msra.mxu0 %v335
    %377 = vmatpush.msra.mxu0 %v333
    %378 = vmatpush.msra.mxu0 %v331
    %379 = vmatpush.msra.mxu0 %v329
    %380 = vmatpush.msra.mxu0 %v327
    %381 = vmatpush.msra.mxu0 %v325
    %382 = vmatpush.msra.mxu0 %v323
    %383 = vmatmul.f32.gmra.mxu0 %v182
    %v384 = vpop.f32.mrf.mxu0
    %v385 = vadd.f32 %v163, %v384
    %386 = vmatmul.f32.gmra.mxu0 %v185
    %v387 = vpop.f32.mrf.mxu0
    %v388 = vadd.f32 %v168, %v387
    %389 = vmatmul.f32.gmra.mxu0 %v188
    %v390 = vpop.f32.mrf.mxu0
    %v391 = vadd.f32 %v173, %v390
    %392 = vmatmul.f32.gmra.mxu0 %v191
    %v393 = vpop.f32.mrf.mxu0
    %v394 = vadd.f32 %v178, %v393
    %395 = vdwg.mxu0
    %v396 = vmax.f32 %v356, 0.0
    %v397 = vmax.f32 %v385, 0.0
    %v398 = vmax.f32 %v359, 0.0
    %v399 = vmax.f32 %v388, 0.0
    %v400 = vmax.f32 %v362, 0.0
    %v401 = vmax.f32 %v391, 0.0
    %v402 = vmax.f32 %v365, 0.0
    %v403 = vmax.f32 %v394, 0.0
    %404 = vmatpush.msra.mxu0 %v123
    %405 = vmatpush.msra.mxu0 %v122
    %406 = vmatpush.msra.mxu0 %v121
    %407 = vmatpush.msra.mxu0 %v120
    %408 = vmatpush.msra.mxu0 %v119
    %409 = vmatpush.msra.mxu0 %v118
    %410 = vmatpush.msra.mxu0 %v117
    %411 = vmatpush.msra.mxu0 %v116
    %412 = vmatpush.msra.mxu0 %v115
    %413 = vmatpush.msra.mxu0 %v114
    %414 = vmatpush.msra.mxu0 %v113
    %415 = vmatpush.msra.mxu0 %v112
    %416 = vmatpush.msra.mxu0 %v111
    %417 = vmatpush.msra.mxu0 %v110
    %418 = vmatpush.msra.mxu0 %v109
    %419 = vmatpush.msra.mxu0 %v108
    %420 = vmatmul.f32.gmra.mxu0 %v396
    %v421 = vpop.f32.mrf.mxu0
    %v422 = vadd.f32 %v140, %v421
    %423 = vmatmul.f32.gmra.mxu0 %v398
    %v424 = vpop.f32.mrf.mxu0
    %v425 = vadd.f32 %v141, %v424
    %426 = vmatmul.f32.gmra.mxu0 %v400
    %v427 = vpop.f32.mrf.mxu0
    %v428 = vadd.f32 %v142, %v427
    %429 = vmatmul.f32.gmra.mxu0 %v402
    %v430 = vpop.f32.mrf.mxu0
    %v431 = vadd.f32 %v143, %v430
    %432 = vdwg.mxu0
    %433 = vmatpush.msra.mxu0 %v139
    %434 = vmatpush.msra.mxu0 %v138
    %435 = vmatpush.msra.mxu0 %v137
    %436 = vmatpush.msra.mxu0 %v136
    %437 = vmatpush.msra.mxu0 %v135
    %438 = vmatpush.msra.mxu0 %v134
    %439 = vmatpush.msra.mxu0 %v133
    %440 = vmatpush.msra.mxu0 %v132
    %441 = vmatpush.msra.mxu0 %v131
    %442 = vmatpush.msra.mxu0 %v130
    %443 = vmatpush.msra.mxu0 %v129
    %444 = vmatpush.msra.mxu0 %v128
    %445 = vmatpush.msra.mxu0 %v127
    %446 = vmatpush.msra.mxu0 %v126
    %447 = vmatpush.msra.mxu0 %v125
    %448 = vmatpush.msra.mxu0 %v124
    %449 = vmatmul.f32.gmra.mxu0 %v397
    %v450 = vpop.f32.mrf.mxu0
    %v451 = vadd.f32 %v422, %v450
    %452 = vmatmul.f32.gmra.mxu0 %v399
    %v453 = vpop.f32.mrf.mxu0
    %v454 = vadd.f32 %v425, %v453
    %455 = vmatmul.f32.gmra.mxu0 %v401
    %v456 = vpop.f32.mrf.mxu0
    %v457 = vadd.f32 %v428, %v456
    %458 = vmatmul.f32.gmra.mxu0 %v403
    %v459 = vpop.f32.mrf.mxu0
    %v460 = vadd.f32 %v431, %v459
    %461 = vdwg.mxu0
    %s462 = scalar_lea.vmem [#allocation8], 32
    %463 = vst [vmem:[%s462] sm:$0xff] %v451
    %464 = vst [vmem:[%s462 + $0x8] sm:$0xff] %v454
    %465 = vst [vmem:[%s462 + $0x10] sm:$0xff] %v457
    %466 = vst [vmem:[%s462 + $0x18] sm:$0xff] %v460
    // Predicated region
    $region34: #{_frame_avg_pool_call.1} parent=1 // pred_check
      _
    $region35: #{_frame_avg_pool_call.1} parent=1 // pred_check_branch
      %468 = sbr.rel (0) target = $region37
    $region36: #{_frame_avg_pool_call.1} parent=1 // pred_region
      %470 = vsyncadd [#allocation4], 0
      %s471 = sshll.u32 [#allocation8], 4
      %s472 = int_to_ptr.vmem [resolvable:$true] %s471
      %s473 = sshll.u32 %s5, 4
      %s474 = int_to_ptr.hbm [resolvable:$true] %s473
      %479 = dma.vmem_to_hbm [thread:$0]  %s472, 1024, %s474, [#allocation4], 128, 128, 8
    $region37: #{_frame_avg_pool_call.1} parent=1 // pred_fallthru
      _
    // Predicated region
    $region38: #{_frame_avg_pool_call.1} parent=1 // pred_check
      _
    $region39: #{_frame_avg_pool_call.1} parent=1 // pred_check_branch
      %481 = sbr.rel (0) target = $region41
    $region40: #{_frame_avg_pool_call.1} parent=1 // pred_region
      %483 = dma.done [#allocation4], 1024
    $region41: #{_frame_avg_pool_call.1} parent=1 // pred_fallthru
      _
    %484 = vsyncpa [#allocation3], 1
    %485 = vsyncpa [#allocation6], 1
    %486 = vsyncpa [#allocation4], 1

</llo_original>
